<compile_context>
chip_gen: v7x
topology: tpu7x:2x2x1
jax: 0.10.0
libtpu: 0.0.40
codegen_flags: <defaults>
</compile_context>

<pallas_src>
import math
import functools

import jax
import jax.numpy as jnp
from jax.experimental import pallas as pl
from jax.experimental.pallas import tpu as pltpu


# --------------------------------------------------------------------------
# Parameter setup (equivalent to PositionalEncoding.__init__)
# --------------------------------------------------------------------------
def make_pe_table(d_model: int, max_len: int) -> jnp.ndarray:
    """Deterministic sin/cos positional-encoding table, shape (max_len, d_model)."""
    position = jnp.arange(0, max_len, dtype=jnp.float32)[:, None]          # (L, 1)
    div_term = jnp.exp(
        jnp.arange(0, d_model, 2, dtype=jnp.float32)
        * (-math.log(10000.0) / d_model)
    )                                                                        # (D/2,)
    pe_sin = jnp.sin(position * div_term)                                   # (L, D/2)
    pe_cos = jnp.cos(position * div_term)                                   # (L, D/2)
    # interleave: pe[:, 0::2] = sin, pe[:, 1::2] = cos
    pe = jnp.stack([pe_sin, pe_cos], axis=-1).reshape(max_len, d_model)
    return pe.astype(jnp.float32)


# --------------------------------------------------------------------------
# Pallas kernels (operate on lane-dense 2-D blocks of shape (TS, B*D))
# --------------------------------------------------------------------------
def _pe_add_kernel(x_ref, pe_ref, o_ref):
    # Pure elementwise add; blocks are (tile_rows, B*D).
    o_ref[...] = x_ref[...] + pe_ref[...]


def _pe_add_dropout_kernel(seed_ref, x_ref, pe_ref, o_ref, *,
                           p: float, tile_rows: int, n_cols: int):
    # seed_ref: SMEM (1,) int32.  x/pe/o: (tile_rows, n_cols) VMEM blocks.
    y = x_ref[...] + pe_ref[...]

    # ---- counter-based hash RNG (portable: int32 VPU ops only) ----------
    shape = y.shape
    i = pl.program_id(0)
    row = jax.lax.broadcasted_iota(jnp.int32, shape, 0) + i * jnp.int32(tile_rows)
    col = jax.lax.broadcasted_iota(jnp.int32, shape, 1)
    h = row * jnp.int32(n_cols) + col                    # global element index
    h = h + seed_ref[0] * jnp.int32(0x632BE5AB)          # fold the seed in
    # lowbias32-style avalanche; '& 0xFFFF' turns the arithmetic shift into a
    # logical one, so this matches the standard unsigned hash bit-for-bit.
    h = (h ^ ((h >> 16) & jnp.int32(0xFFFF))) * jnp.int32(0x045D9F3B)
    h = (h ^ ((h >> 16) & jnp.int32(0xFFFF))) * jnp.int32(0x045D9F3B)
    h = h ^ ((h >> 16) & jnp.int32(0xFFFF))

    # keep with probability (1 - p); 24-bit threshold granularity.
    u = h & jnp.int32(0x00FFFFFF)
    thr = jnp.int32(min(int(round(p * float(1 << 24))), (1 << 24) - 1))
    scale = jnp.float32(1.0 / (1.0 - p))
    keep_f = jnp.where(u >= thr, scale, jnp.float32(0.0))
    o_ref[...] = (y * keep_f).astype(o_ref.dtype)


# --------------------------------------------------------------------------
# Wrapper
# --------------------------------------------------------------------------
def positional_encoding(
    x: jnp.ndarray,
    pe_table: jnp.ndarray,
    *,
    dropout_p: float = 0.1,
    training: bool = False,
    seed: int = 0,
    target_block_bytes: int = 2 * 1024 * 1024,
) -> jnp.ndarray:
    """Forward pass of PositionalEncoding.

    x        : (S, B, D) float32
    pe_table : (max_len, D) float32, S <= max_len
    """
    S, B, D = x.shape
    assert pe_table.shape[0] >= S and pe_table.shape[1] == D
    BD = B * D

    # Lane-dense 2-D view; pe broadcast over batch is pre-tiled once (tiny).
    x2 = x.reshape(S, BD)
    pe2 = jnp.tile(pe_table[:S].astype(x.dtype), (1, B))        # (S, BD)

    # Row-tile so each block is ~target_block_bytes (multiple of 8 sublanes).
    row_bytes = BD * x.dtype.itemsize
    max_rows = max(1, target_block_bytes // row_bytes)
    if max_rows >= S:
        tile_rows = S                       # single full-extent block
    else:
        tile_rows = max(8, (max_rows // 8) * 8)
        if tile_rows >= S:
            tile_rows = S
    grid = (pl.cdiv(S, tile_rows),)

    blk = (tile_rows, BD)
    x_spec = pl.BlockSpec(blk, lambda i: (i, 0))
    pe_spec = pl.BlockSpec(blk, lambda i: (i, 0))
    out_spec = pl.BlockSpec(blk, lambda i: (i, 0))
    out_shape = jax.ShapeDtypeStruct((S, BD), x.dtype)
    cparams = pltpu.CompilerParams(dimension_semantics=("parallel",))

    if not training or dropout_p == 0.0:
        out2 = pl.pallas_call(
            _pe_add_kernel,
            out_shape=out_shape,
            grid=grid,
            in_specs=[x_spec, pe_spec],
            out_specs=out_spec,
            compiler_params=cparams,
        )(x2, pe2)
        return out2.reshape(S, B, D)

    if dropout_p >= 1.0:                     # matches torch: everything dropped
        return jnp.zeros_like(x)

    seed_arr = jnp.asarray([seed], dtype=jnp.int32)
    kern = functools.partial(
        _pe_add_dropout_kernel, p=float(dropout_p),
        tile_rows=tile_rows, n_cols=BD,
    )
    out2 = pl.pallas_call(
        kern,
        out_shape=out_shape,
        grid=grid,
        in_specs=[
            pl.BlockSpec(memory_space=pltpu.MemorySpace.SMEM),   # seed scalar
            x_spec,
            pe_spec,
        ],
        out_specs=out_spec,
        compiler_params=cparams,
    )(seed_arr, x2, pe2)
    return out2.reshape(S, B, D)


# --------------------------------------------------------------------------
# Main
# --------------------------------------------------------------------------
if __name__ == "__main__":
    d_model = 32
    max_len = 64
    seq = 8
    batch = 2
    dropout_p = 0.1

    key = jax.random.PRNGKey(0)
    x = jax.random.normal(key, (seq, batch, d_model), dtype=jnp.float32)

    pe_table = make_pe_table(d_model, max_len)

    # eval-mode forward (dropout = identity) -> deterministic, checkable
    out_eval = positional_encoding(
        x, pe_table, dropout_p=dropout_p, training=False
    )
    out_eval = jax.block_until_ready(out_eval)

    # reference in plain JAX
    ref = x + pe_table[:seq][:, None, :]
    assert jnp.allclose(out_eval, ref, atol=1e-6), "eval-mode mismatch"

    # training-mode forward (dropout active, deterministic hash-based mask)
    out_train = positional_encoding(
        x, pe_table, dropout_p=dropout_p, training=True, seed=42
    )
    out_train = jax.block_until_ready(out_train)
    # every surviving element equals ref / (1 - p); dropped ones are exactly 0
    scaled_ref = ref / (1.0 - dropout_p)
    ok = jnp.all(
        jnp.isclose(out_train, scaled_ref, atol=1e-5) | (out_train == 0.0)
    )
    assert bool(ok), "training-mode dropout mismatch"
    # loose sanity on the drop fraction (expected ~= dropout_p)
    drop_frac = float(jnp.mean((out_train == 0.0).astype(jnp.float32)))
    assert drop_frac < 0.5, "dropout dropped implausibly many elements"

    print("KERNEL_OK")
</pallas_src>

<mosaic_0001>
module attributes {stable_mosaic.version = 11 : i64} {
  func.func @_pe_add_kernel(%arg0: i32, %arg1: memref<8x64xf32, #tpu.memory_space<vmem>>, %arg2: memref<8x64xf32, #tpu.memory_space<vmem>>, %arg3: memref<8x64xf32, #tpu.memory_space<vmem>>) attributes {dimension_semantics = [#tpu.dimension_semantics<parallel>], iteration_bounds = array<i64: 1>, scalar_prefetch = 0 : i64, scratch_operands = 0 : i64, tpu.core_type = #tpu.core_type<tc>, window_params = [{transform_indices = @transform_0, window_bounds = array<i64: 8, 64>}, {transform_indices = @transform_1, window_bounds = array<i64: 8, 64>}, {transform_indices = @transform_2, window_bounds = array<i64: 8, 64>}]} {
    %c0 = arith.constant 0 : index
    %c0_0 = arith.constant 0 : index
    %0 = vector.load %arg1[%c0, %c0_0] : memref<8x64xf32, #tpu.memory_space<vmem>>, vector<8x64xf32>
    %c0_1 = arith.constant 0 : index
    %c0_2 = arith.constant 0 : index
    %1 = vector.load %arg2[%c0_1, %c0_2] : memref<8x64xf32, #tpu.memory_space<vmem>>, vector<8x64xf32>
    %2 = arith.addf %0, %1 : vector<8x64xf32>
    %c0_3 = arith.constant 0 : index
    %c0_4 = arith.constant 0 : index
    %3 = vector.load %arg3[%c0_3, %c0_4] : memref<8x64xf32, #tpu.memory_space<vmem>>, vector<8x64xf32>
    tpu.vector_store %arg3[%c0_3, %c0_4], %2 {strides = array<i32>} : memref<8x64xf32, #tpu.memory_space<vmem>>, vector<8x64xf32>,
    return
  }
  func.func @transform_0(%arg0: i32) -> (i32, i32) {
    %c0_i32 = arith.constant 0 : i32
    %c0_i32_0 = arith.constant 0 : i32
    return %arg0, %c0_i32 : i32, i32
  }
  func.func @transform_1(%arg0: i32) -> (i32, i32) {
    %c0_i32 = arith.constant 0 : i32
    %c0_i32_0 = arith.constant 0 : i32
    return %arg0, %c0_i32 : i32, i32
  }
  func.func @transform_2(%arg0: i32) -> (i32, i32) {
    %c0_i32 = arith.constant 0 : i32
    %c0_i32_0 = arith.constant 0 : i32
    return %arg0, %c0_i32 : i32, i32
  }
}

</mosaic_0001>

<llo_original>
// kernel: tpu_custom_call.1
$region0: #{tpu_custom_call.1}
  #allocation0 [shape = 'u32[]', space=smem, size = 0x4, offset = 0x4, fixed_abs, tag = 'smem constant byte address 0x4 - core index']
  #allocation1 [shape = 'u32[144,128]{1,0:T(1,128)}', space=vmem, size = 0x12000, scoped, tag = 'internal scratch']
  %s0 = inlined_call_operand.hbm [shape: f32[8,64], index: 0, kind: input, shape index: {}]
  %s1 = inlined_call_operand.hbm [shape: f32[8,64], index: 1, kind: input, shape index: {}]
  %s2 = inlined_call_operand.hbm [shape: f32[8,64], index: 2, kind: output, shape index: {}]
  %s3 = sld [smem:[#allocation0]]
  $region26: #{tpu_custom_call.1} parent=0
    _
  %s5 = ssub.s32 1, %s3
  %s6 = scalar_select 0, %s5, %s3
  $region1: #{tpu_custom_call.1} parent=0
    #allocation2 [shape = 'u8[4096]{0}', space=vmem, size = 0x1000, scoped, tag = 'input window, operand 0, single buffered']
    #allocation3 [shape = 's32[1]{0}', space=sflag, size = 0x4, scoped, tag = 'scoped memory for tpu_custom_call.1']
    #allocation4 [shape = 's32[1]{0}', space=sflag, size = 0x4, scoped, tag = 'scoped memory for tpu_custom_call.1']
    #allocation5 [shape = 'u8[4096]{0}', space=vmem, size = 0x1000, scoped, tag = 'input window, operand 1, single buffered']
    #allocation6 [shape = 's32[1]{0}', space=sflag, size = 0x4, scoped, tag = 'scoped memory for tpu_custom_call.1']
    #allocation7 [shape = 'u8[4096]{0}', space=vmem, size = 0x1000, scoped, tag = 'output window, operand 0, single buffered']
    %7 = vsyncpa [#allocation3], 0
    %8 = vsyncpa [#allocation6], 0
    %9 = vsyncpa [#allocation4], 0
    // Predicated region
    $region2: #{tpu_custom_call.1} parent=1 // pred_check
      _
    $region3: #{tpu_custom_call.1} parent=1 // pred_check_branch
      %11 = sbr.rel (0) target = $region5
    $region4: #{tpu_custom_call.1} parent=1 // pred_region
      %s13 = ssub.s32 128, 128
      %14 = vsyncadd [#allocation3], %s13
      %s16 = sshll.u32 [#allocation2], 4
      %s17 = int_to_ptr.vmem [resolvable:$true] %s16
      %19 = dma.hbm_to_vmem [thread:$0]  %s0, 128, %s17, [#allocation3]
    $region5: #{tpu_custom_call.1} parent=1 // pred_fallthru
      _
    // Predicated region
    $region6: #{tpu_custom_call.1} parent=1 // pred_check
      _
    $region7: #{tpu_custom_call.1} parent=1 // pred_check_branch
      %21 = sbr.rel (0) target = $region9
    $region8: #{tpu_custom_call.1} parent=1 // pred_region
      %s23 = ssub.s32 128, 128
      %24 = vsyncadd [#allocation6], %s23
      %s26 = sshll.u32 [#allocation5], 4
      %s27 = int_to_ptr.vmem [resolvable:$true] %s26
      %29 = dma.hbm_to_vmem [thread:$0]  %s1, 128, %s27, [#allocation6]
    $region9: #{tpu_custom_call.1} parent=1 // pred_fallthru
      _
    // Predicated region
    $region10: #{tpu_custom_call.1} parent=1 // pred_check
      _
    $region11: #{tpu_custom_call.1} parent=1 // pred_check_branch
      %31 = sbr.rel (0) target = $region13
    $region12: #{tpu_custom_call.1} parent=1 // pred_region
      %32 = dma.done [#allocation3], 128
    $region13: #{tpu_custom_call.1} parent=1 // pred_fallthru
      _
    // Predicated region
    $region14: #{tpu_custom_call.1} parent=1 // pred_check
      _
    $region15: #{tpu_custom_call.1} parent=1 // pred_check_branch
      %34 = sbr.rel (0) target = $region17
    $region16: #{tpu_custom_call.1} parent=1 // pred_region
      %35 = dma.done [#allocation6], 128
    $region17: #{tpu_custom_call.1} parent=1 // pred_fallthru
      _
    %v36 = vld [vmem:[#allocation2] sm:$0xff]
    %v37 = vld [vmem:[#allocation5] sm:$0xff]
    %v38 = vadd.f32 %v36, %v37
    %vm39 = vcmask 523264
    %40 = vst.msk [vmem:[#allocation7] sm:$0xff] %vm39, %v38
    // Predicated region
    $region18: #{tpu_custom_call.1} parent=1 // pred_check
      _
    $region19: #{tpu_custom_call.1} parent=1 // pred_check_branch
      %42 = sbr.rel (0) target = $region21
    $region20: #{tpu_custom_call.1} parent=1 // pred_region
      %s44 = ssub.s32 128, 128
      %45 = vsyncadd [#allocation4], %s44
      %s47 = sshll.u32 [#allocation7], 4
      %s48 = int_to_ptr.vmem [resolvable:$true] %s47
      %50 = dma.vmem_to_hbm [thread:$0]  %s48, 128, %s2, [#allocation4]
    $region21: #{tpu_custom_call.1} parent=1 // pred_fallthru
      _
    // Predicated region
    $region22: #{tpu_custom_call.1} parent=1 // pred_check
      _
    $region23: #{tpu_custom_call.1} parent=1 // pred_check_branch
      %52 = sbr.rel (0) target = $region25
    $region24: #{tpu_custom_call.1} parent=1 // pred_region
      %53 = dma.done [#allocation4], 128
    $region25: #{tpu_custom_call.1} parent=1 // pred_fallthru
      _
    %54 = vsyncpa [#allocation3], 1
    %55 = vsyncpa [#allocation6], 1
    %56 = vsyncpa [#allocation4], 1

</llo_original>
